<compile_context>
chip_gen: v7x
topology: tpu7x:2x2x1
jax: 0.10.0
libtpu: 0.0.40
codegen_flags: <defaults>
</compile_context>

<pallas_src>
import functools

import jax
import jax.numpy as jnp
from jax import lax
from jax.experimental import pallas as pl
from jax.experimental.pallas import tpu as pltpu


def _round_up(x, m):
    return ((x + m - 1) // m) * m


def _moe_kernel(x_ref, wg_ref, bg_ref, expand_ref, out_ref, avgp_ref, *,
                batch, block_rows, gate_bf16):
    """x_ref: (TB, EDp); wg_ref: (EDp, EP); bg_ref: (1, EP); expand_ref: (EP, EDp).
       out_ref: (TB, EDp) weighted-concatenated output tile.
       avgp_ref: (8, EP) per-tile partial sum of gating weights (scaled 1/8)."""
    x = x_ref[...]                                              # (TB, EDp) f32

    # --- gating network: Linear + softmax (MXU + EUP) ---
    # Padded gate columns carry bias -1e30 -> exp underflows to 0, so the
    # softmax over EP lanes equals the softmax over the first E lanes.
    xg = x.astype(jnp.bfloat16) if gate_bf16 else x
    logits = jnp.dot(xg, wg_ref[...],
                     preferred_element_type=jnp.float32) + bg_ref[...]
    m = jnp.max(logits, axis=-1, keepdims=True)
    ex = jnp.exp(logits - m)
    # Exact divide: kernel is HBM-bound, the VPU divide is free in wall-clock.
    weights = ex / jnp.sum(ex, axis=-1, keepdims=True)          # (TB, EP)

    # --- expand (TB, EP) -> (TB, EDp) via one-hot matmul on the MXU ---
    # expand[e, e*D + d] = 1, so (weights @ expand)[b, e*D + d] = weights[b, e].
    w_full = jnp.dot(weights, expand_ref[...],
                     preferred_element_type=jnp.float32)        # (TB, EDp)
    out_ref[...] = x * w_full

    # --- per-tile partial batch-sum of gating weights ---
    # Select-based mask so garbage rows of a ragged last block (possibly NaN)
    # cannot leak into the average.
    row = pl.program_id(0) * block_rows + lax.broadcasted_iota(
        jnp.int32, weights.shape, 0)
    w_masked = jnp.where(row < batch, weights, 0.0)
    partial = jnp.sum(w_masked, axis=0, keepdims=True)          # (1, EP)
    # Replicate partial/8 across the 8 sublanes so the wrapper can just sum.
    avgp_ref[...] = jnp.broadcast_to(partial * 0.125, avgp_ref.shape)


def weighted_concatenation_moe(combined_outputs, gate_w, gate_b, *,
                               block_rows=None, gate_bf16=False,
                               target_tile_bytes=4 << 20,
                               vmem_budget_bytes=44 << 20):
    """combined_outputs: (B, E, D) f32; gate_w: (E*D, E); gate_b: (E,).
       Returns (concatenated_output (B, E*D), avg_weights_for_batch (E,))."""
    B, E, D = combined_outputs.shape
    ED = E * D
    EDp = _round_up(ED, 128)       # lane-dense main output
    EP = _round_up(E, 128)         # lane-dense gate / weights / avg partials

    x_flat = combined_outputs.reshape(B, ED)   # same as torch .reshape(B, -1)
    if EDp != ED:
        # One-time lane pad so the dominant (tb, EDp) store is unmasked.
        x_flat = jnp.pad(x_flat, ((0, 0), (0, EDp - ED)))

    # Gate params padded to lane-dense shapes; cast hoisted out of the kernel.
    gw = jnp.zeros((EDp, EP), jnp.float32).at[:ED, :E].set(
        gate_w.astype(jnp.float32))
    if gate_bf16:
        gw = gw.astype(jnp.bfloat16)
    bg = jnp.full((1, EP), -1e30, jnp.float32).at[0, :E].set(
        gate_b.astype(jnp.float32))
    # One-hot expansion matrix: expand[e, e*D + d] = 1.
    expand = jnp.zeros((EP, EDp), jnp.float32).at[:E, :ED].set(
        jnp.repeat(jnp.eye(E, dtype=jnp.float32), D, axis=1))

    # --- tile selection: ~target_tile_bytes of x per step, VMEM-budgeted ---
    row_bytes = EDp * 4
    resident_bytes = int(gw.size) * gw.dtype.itemsize + EP * 4 + EP * EDp * 4
    row_cap = max(8, (B // 8) * 8) if B >= 8 else 8
    if block_rows is None:
        max_by_vmem = (vmem_budget_bytes - 2 * resident_bytes - (4 << 20)) // (
            4 * row_bytes)
        tb = min(target_tile_bytes // row_bytes, max_by_vmem)
        tb = max(8, (int(tb) // 8) * 8)
        tb = min(tb, row_cap)
        # Best-effort even tile count so v7x's two TCs get balanced halves.
        nt = pl.cdiv(B, tb)
        if nt > 1 and nt % 2 == 1:
            tb = max(8, _round_up(pl.cdiv(B, nt + 1), 8))
    else:
        tb = _round_up(min(block_rows, row_cap), 8)

    num_tiles = pl.cdiv(B, tb)
    vmem_limit = int(min(max(32 << 20,
                             4 * tb * row_bytes + 2 * resident_bytes + (4 << 20)),
                         vmem_budget_bytes))

    kernel = functools.partial(_moe_kernel, batch=B, block_rows=tb,
                               gate_bf16=gate_bf16)

    out, avg_partial = pl.pallas_call(
        kernel,
        out_shape=(
            jax.ShapeDtypeStruct((B, EDp), jnp.float32),
            jax.ShapeDtypeStruct((num_tiles * 8, EP), jnp.float32),
        ),
        grid=(num_tiles,),
        in_specs=[
            pl.BlockSpec((tb, EDp), lambda i: (i, 0)),   # x tile (pipelined)
            pl.BlockSpec((EDp, EP), lambda i: (0, 0)),   # gate W (resident)
            pl.BlockSpec((1, EP), lambda i: (0, 0)),     # gate b (resident)
            pl.BlockSpec((EP, EDp), lambda i: (0, 0)),   # one-hot (resident)
        ],
        out_specs=(
            pl.BlockSpec((tb, EDp), lambda i: (i, 0)),   # weighted concat tile
            pl.BlockSpec((8, EP), lambda i: (i, 0)),     # per-tile partial sums
        ),
        compiler_params=pltpu.CompilerParams(
            dimension_semantics=("parallel",),           # v7x 2-TC sharding
            vmem_limit_bytes=vmem_limit,
        ),
    )(x_flat, gw, bg, expand)

    concatenated = out if EDp == ED else out[:, :ED]
    avg = jnp.sum(avg_partial[:, :E], axis=0) / jnp.float32(B)
    return concatenated, avg


def _reference(combined_outputs, gate_w, gate_b):
    B, E, D = combined_outputs.shape
    x_flat = combined_outputs.reshape(B, E * D)
    logits = jnp.dot(x_flat, gate_w,
                     precision=jax.lax.Precision.HIGHEST) + gate_b
    weights = jax.nn.softmax(logits, axis=-1)
    concat = (weights[:, :, None] * combined_outputs).reshape(B, E * D)
    avg = jnp.sum(weights, axis=0) / B
    return concat, avg


def _run_case(key, B, E, D, **kw):
    kx, kw_, kb = jax.random.split(key, 3)
    combined_outputs = jax.random.normal(kx, (B, E, D), dtype=jnp.float32)
    gate_w = (jax.random.normal(kw_, (E * D, E), dtype=jnp.float32)
              * (1.0 / jnp.sqrt(E * D)))
    gate_b = jax.random.normal(kb, (E,), dtype=jnp.float32) * 0.01
    out, avg = weighted_concatenation_moe(combined_outputs, gate_w, gate_b, **kw)
    jax.block_until_ready((out, avg))
    ref_out, ref_avg = _reference(combined_outputs, gate_w, gate_b)
    return out, avg, ref_out, ref_avg


if __name__ == "__main__":
    key = jax.random.PRNGKey(0)
    k1, k2 = jax.random.split(key)

    # Case 1: ED = 128 (lane-aligned), B = 20 not a tile multiple.
    # block_rows=8 -> 3 grid tiles (last one ragged) to exercise BlockSpec
    # pipelining, the masked write-back of the ragged block, and the
    # select-based masking of padded rows in the avg partial sums.
    B, E, D = 20, 4, 32
    out, avg, ref_out, ref_avg = _run_case(k1, B, E, D, block_rows=8)
    assert out.shape == (B, E * D) and avg.shape == (E,)
    # Exact softmax divide -> tight agreement with the f32 reference.
    assert jnp.allclose(out, ref_out, atol=1e-3, rtol=1e-3)
    assert jnp.allclose(avg, ref_avg, atol=1e-3, rtol=1e-3)

    # Case 1b: bf16-gating MXU path (opt-in) — looser numeric check.
    out_bf, avg_bf, ref_out, ref_avg = _run_case(k1, B, E, D, block_rows=8,
                                                 gate_bf16=True)
    assert jnp.allclose(out_bf, ref_out, atol=5e-2, rtol=5e-2)
    assert jnp.allclose(avg_bf, ref_avg, atol=5e-2, rtol=5e-2)

    # Case 2: ED = 60 (not a multiple of 128) -> exercises the lane-pad path
    # and the EP-padded gate/softmax; auto tile selection.
    B2, E2, D2 = 20, 3, 20
    out2, avg2, ref_out2, ref_avg2 = _run_case(k2, B2, E2, D2)
    assert out2.shape == (B2, E2 * D2) and avg2.shape == (E2,)
    assert jnp.allclose(out2, ref_out2, atol=1e-3, rtol=1e-3)
    assert jnp.allclose(avg2, ref_avg2, atol=1e-3, rtol=1e-3)

    print("KERNEL_OK")
</pallas_src>

<mosaic_0001>
module attributes {stable_mosaic.version = 11 : i64} {
  func.func @_moe_kernel(%arg0: i32, %arg1: memref<8x128xf32, #tpu.memory_space<vmem>>, %arg2: memref<128x128xf32, #tpu.memory_space<vmem>>, %arg3: memref<1x128xf32, #tpu.memory_space<vmem>>, %arg4: memref<128x128xf32, #tpu.memory_space<vmem>>, %arg5: memref<8x128xf32, #tpu.memory_space<vmem>>, %arg6: memref<8x128xf32, #tpu.memory_space<vmem>>) attributes {dimension_semantics = [#tpu.dimension_semantics<parallel>], iteration_bounds = array<i64: 3>, scalar_prefetch = 0 : i64, scratch_operands = 0 : i64, tpu.core_type = #tpu.core_type<tc>, window_params = [{transform_indices = @transform_0, window_bounds = array<i64: 8, 128>}, {pipeline_mode = #tpu.pipeline_mode<synchronous>, transform_indices = @transform_1, window_bounds = array<i64: 128, 128>}, {pipeline_mode = #tpu.pipeline_mode<synchronous>, transform_indices = @transform_2, window_bounds = array<i64: 1, 128>}, {pipeline_mode = #tpu.pipeline_mode<synchronous>, transform_indices = @transform_3, window_bounds = array<i64: 128, 128>}, {transform_indices = @transform_4, window_bounds = array<i64: 8, 128>}, {transform_indices = @transform_5, window_bounds = array<i64: 8, 128>}]} {
    %c0 = arith.constant 0 : index
    %c0_0 = arith.constant 0 : index
    %0 = vector.load %arg1[%c0, %c0_0] : memref<8x128xf32, #tpu.memory_space<vmem>>, vector<8x128xf32>
    %c0_1 = arith.constant 0 : index
    %c0_2 = arith.constant 0 : index
    %1 = vector.load %arg2[%c0_1, %c0_2] : memref<128x128xf32, #tpu.memory_space<vmem>>, vector<128x128xf32>
    %cst = arith.constant dense<0.000000e+00> : vector<8x128xf32>
    %2 = tpu.matmul %0, %1, %cst {dimension_numbers = #tpu.dot_dimension_numbers<[1], [0], [0], [1], [0, 0, 1, 1], [], []>} : vector<8x128xf32>, vector<128x128xf32>, vector<8x128xf32> -> vector<8x128xf32>
    %c0_3 = arith.constant 0 : index
    %c0_4 = arith.constant 0 : index
    %3 = vector.load %arg3[%c0_3, %c0_4] : memref<1x128xf32, #tpu.memory_space<vmem>>, vector<1x128xf32>
    %4 = vector.broadcast %3 : vector<1x128xf32> to vector<8x128xf32>
    %5 = arith.addf %2, %4 : vector<8x128xf32>
    %cst_5 = arith.constant dense<0xFF800000> : vector<8xf32>
    %6 = vector.multi_reduction <maximumf>, %5, %cst_5 [1] : vector<8x128xf32> to vector<8xf32>
    %7 = vector.shape_cast %6 : vector<8xf32> to vector<8x1xf32>
    %8 = vector.broadcast %7 : vector<8x1xf32> to vector<8x128xf32>
    %9 = arith.subf %5, %8 : vector<8x128xf32>
    %10 = math.exp %9 : vector<8x128xf32>
    %cst_6 = arith.constant dense<0.000000e+00> : vector<8xf32>
    %11 = vector.multi_reduction <add>, %10, %cst_6 [1] : vector<8x128xf32> to vector<8xf32>
    %12 = vector.shape_cast %11 : vector<8xf32> to vector<8x1xf32>
    %13 = vector.broadcast %12 : vector<8x1xf32> to vector<8x128xf32>
    %14 = arith.divf %10, %13 : vector<8x128xf32>
    %c0_7 = arith.constant 0 : index
    %c0_8 = arith.constant 0 : index
    %15 = vector.load %arg4[%c0_7, %c0_8] : memref<128x128xf32, #tpu.memory_space<vmem>>, vector<128x128xf32>
    %cst_9 = arith.constant dense<0.000000e+00> : vector<8x128xf32>
    %16 = tpu.matmul %14, %15, %cst_9 {dimension_numbers = #tpu.dot_dimension_numbers<[1], [0], [0], [1], [0, 0, 1, 1], [], []>} : vector<8x128xf32>, vector<128x128xf32>, vector<8x128xf32> -> vector<8x128xf32>
    %17 = arith.mulf %0, %16 : vector<8x128xf32>
    %c0_10 = arith.constant 0 : index
    %c0_11 = arith.constant 0 : index
    %18 = vector.load %arg5[%c0_10, %c0_11] : memref<8x128xf32, #tpu.memory_space<vmem>>, vector<8x128xf32>
    tpu.vector_store %arg5[%c0_10, %c0_11], %17 {strides = array<i32>} : memref<8x128xf32, #tpu.memory_space<vmem>>, vector<8x128xf32>,
    %c8_i32 = arith.constant 8 : i32
    %19 = arith.muli %arg0, %c8_i32 : i32
    %20 = tpu.iota {dimensions = array<i32: 0>} : vector<8x128xi32>
    %21 = vector.broadcast %19 : i32 to vector<8x128xi32>
    %22 = arith.addi %21, %20 : vector<8x128xi32>
    %c20_i32 = arith.constant 20 : i32
    %23 = vector.broadcast %c20_i32 : i32 to vector<8x128xi32>
    %24 = arith.cmpi slt, %22, %23 : vector<8x128xi32>
    %cst_12 = arith.constant 0.000000e+00 : f32
    %25 = vector.broadcast %cst_12 : f32 to vector<8x128xf32>
    %26 = arith.select %24, %14, %25 : vector<8x128xi1>, vector<8x128xf32>
    %cst_13 = arith.constant dense<0.000000e+00> : vector<128xf32>
    %27 = vector.multi_reduction <add>, %26, %cst_13 [0] : vector<8x128xf32> to vector<128xf32>
    %28 = vector.shape_cast %27 : vector<128xf32> to vector<1x128xf32>
    %cst_14 = arith.constant 1.250000e-01 : f32
    %29 = vector.broadcast %cst_14 : f32 to vector<1x128xf32>
    %30 = arith.mulf %28, %29 : vector<1x128xf32>
    %31 = vector.shape_cast %30 : vector<1x128xf32> to vector<1x128xf32>
    %32 = vector.broadcast %31 : vector<1x128xf32> to vector<8x128xf32>
    %c0_15 = arith.constant 0 : index
    %c0_16 = arith.constant 0 : index
    %33 = vector.load %arg6[%c0_15, %c0_16] : memref<8x128xf32, #tpu.memory_space<vmem>>, vector<8x128xf32>
    tpu.vector_store %arg6[%c0_15, %c0_16], %32 {strides = array<i32>} : memref<8x128xf32, #tpu.memory_space<vmem>>, vector<8x128xf32>,
    return
  }
  func.func @transform_0(%arg0: i32) -> (i32, i32) {
    %c0_i32 = arith.constant 0 : i32
    %c0_i32_0 = arith.constant 0 : i32
    return %arg0, %c0_i32 : i32, i32
  }
  func.func @transform_1(%arg0: i32) -> (i32, i32) {
    %c0_i32 = arith.constant 0 : i32
    %c0_i32_0 = arith.constant 0 : i32
    %c0_i32_1 = arith.constant 0 : i32
    return %c0_i32, %c0_i32_0 : i32, i32
  }
  func.func @transform_2(%arg0: i32) -> (i32, i32) {
    %c0_i32 = arith.constant 0 : i32
    %c0_i32_0 = arith.constant 0 : i32
    %c0_i32_1 = arith.constant 0 : i32
    return %c0_i32, %c0_i32_0 : i32, i32
  }
  func.func @transform_3(%arg0: i32) -> (i32, i32) {
    %c0_i32 = arith.constant 0 : i32
    %c0_i32_0 = arith.constant 0 : i32
    %c0_i32_1 = arith.constant 0 : i32
    return %c0_i32, %c0_i32_0 : i32, i32
  }
  func.func @transform_4(%arg0: i32) -> (i32, i32) {
    %c0_i32 = arith.constant 0 : i32
    %c0_i32_0 = arith.constant 0 : i32
    return %arg0, %c0_i32 : i32, i32
  }
  func.func @transform_5(%arg0: i32) -> (i32, i32) {
    %c0_i32 = arith.constant 0 : i32
    %c0_i32_0 = arith.constant 0 : i32
    return %arg0, %c0_i32 : i32, i32
  }
}

</mosaic_0001>

<llo_original>
// kernel: tpu_custom_call.1
$region0: #{tpu_custom_call.1}
  #allocation0 [shape = 'u32[]', space=smem, size = 0x4, offset = 0x4, fixed_abs, tag = 'smem constant byte address 0x4 - core index']
  #allocation1 [shape = 'u32[144,128]{1,0:T(1,128)}', space=vmem, size = 0x12000, scoped, tag = 'internal scratch']
  %s0 = inlined_call_operand.hbm [shape: f32[20,128], index: 0, kind: input, shape index: {}]
  %s1 = inlined_call_operand.hbm [shape: f32[128,128], index: 1, kind: input, shape index: {}]
  %s2 = inlined_call_operand.vmem [shape: f32[1,128], index: 2, kind: input, shape index: {}]
  %s3 = inlined_call_operand.hbm [shape: f32[128,128], index: 3, kind: input, shape index: {}]
  %s4 = inlined_call_operand.hbm [shape: f32[20,128], index: 4, kind: output, shape index: {0}]
  %s5 = inlined_call_operand.hbm [shape: f32[24,128], index: 5, kind: output, shape index: {1}]
  %6 = xla_tuple %s4, %s5
  %s7 = sld [smem:[#allocation0]]
  $region69: #{tpu_custom_call.1} parent=0
    _
  %s9 = ssub.s32 1, %s7
  %s10 = scalar_select 0, %s9, %s7
  $region1: #{tpu_custom_call.1} parent=0
    #allocation2 [shape = 'u8[8192]{0}', space=vmem, size = 0x2000, scoped, tag = 'input window, operand 0']
    #allocation3 [shape = 's32[2]{0}', space=sflag, size = 0x8, scoped, tag = 'scoped memory for tpu_custom_call.1']
    #allocation4 [shape = 's32[2]{0}', space=sflag, size = 0x8, scoped, tag = 'scoped memory for tpu_custom_call.1']
    #allocation5 [shape = 'u8[65536]{0}', space=vmem, size = 0x10000, scoped, tag = 'input window, operand 1, single buffered']
    #allocation6 [shape = 's32[1]{0}', space=sflag, size = 0x4, scoped, tag = 'scoped memory for tpu_custom_call.1']
    #allocation7 [shape = 'u8[65536]{0}', space=vmem, size = 0x10000, scoped, tag = 'input window, operand 3, single buffered']
    #allocation8 [shape = 'u8[8192]{0}', space=vmem, size = 0x2000, scoped, tag = 'output window, operand 0']
    #allocation9 [shape = 'u8[8192]{0}', space=vmem, size = 0x2000, scoped, tag = 'output window, operand 1']
    #allocation10 [shape = 's32[2]{0}', space=sflag, size = 0x8, scoped, tag = 'scoped memory for tpu_custom_call.1']
    %11 = vsyncpa [#allocation3], 0
    %s12 = scalar_lea.sflag [#allocation3], 1
    %13 = vsyncpa %s12, 0
    %14 = vsyncpa [#allocation6], 0
    %15 = vsyncpa [#allocation4], 0
    %s16 = scalar_lea.sflag [#allocation4], 1
    %17 = vsyncpa %s16, 0
    %18 = vsyncpa [#allocation10], 0
    %s19 = scalar_lea.sflag [#allocation10], 1
    %20 = vsyncpa %s19, 0
    loop: start=0, step=1, limit=5
    $region2: #{tpu_custom_call.1} parent=1 // loop_pre_header
      _
    $region3: #{tpu_custom_call.1} parent=1 // loop_header
      %s22 = sphi 0, %s26
      %p23 = scmp.ge.s32.totalorder %s22, 5
      %s32 = sphi 0, %s34
      %s35 = sphi 0, %s32
      %s36 = sphi 0, %s35
      %s52 = sphi 0, %s36
      %s56 = sphi 0, %s56
      %s58 = sphi 0, %s56
      %s59 = sphi 0, %s58
      %s73 = sphi 0, %s59
      %s77 = sphi 0, %s77
      %s79 = sphi 0, %s77
      %s80 = sphi 0, %s79
      %s94 = sphi 0, %s80
      %s98 = sphi 0, %s98
      %s100 = sphi 0, %s98
      %s101 = sphi 0, %s100
      %s115 = sphi 0, %s101
      %s121 = sphi 0, %s123
      %s124 = sphi 0, %s121
      %s125 = sphi 0, %s124
      %s141 = sphi 0, %s125
      %s147 = sphi 0, %s149
      %s150 = sphi 0, %s147
      %s151 = sphi 0, %s150
      %s167 = sphi 0, %s151
    $region4: #{tpu_custom_call.1} parent=1 // loop_header_branch
      %25 = sbr.rel (%p23) target = $region8
    $region5: #{tpu_custom_call.1} parent=1 // loop_body
      %s27 = ssub.s32 %s22, 1
      %s28 = ssub.s32 %s22, 2
      %s29 = sadd.s32 %s22, 1
      %s30 = ssub.s32 %s22, %s29
      %p31 = scmp.eq.s32.totalorder %s30, 0
      %s33 = sadd.s32 %s32, 1
      %s34 = scalar_select %p31, %s32, %s33
      %p37 = pneg %p31
      %p38 = scmp.eq.s32.totalorder %s22, 2
      %p39 = por %p37, %p38
      %p40 = scmp.ne.s32.totalorder %s32, %s35
      %p41 = scmp.eq.s32.totalorder %s22, 0
      %p42 = por %p40, %p41
      %p43 = scmp.ne.s32.totalorder %s32, %s35
      %p44 = scmp.eq.s32.totalorder %s27, 2
      %p45 = por %p43, %p44
      %p46 = scmp.ne.s32.totalorder %s35, %s36
      %p47 = scmp.eq.s32.totalorder %s27, 0
      %p48 = por %p46, %p47
      %p49 = scmp.ne.s32.totalorder %s35, %s36
      %p50 = scmp.eq.s32.totalorder %s28, 2
      %p51 = por %p49, %p50
      %p53 = scmp.ne.s32.totalorder %s36, %s52
      %p54 = scmp.eq.s32.totalorder %s28, 0
      %p55 = por %p53, %p54
      %s57 = sadd.s32 %s56, 1
      %p60 = scmp.eq.s32.totalorder %s22, 2
      %p61 = scmp.ne.s32.totalorder %s56, %s58
      %p62 = scmp.eq.s32.totalorder %s22, 0
      %p63 = por %p61, %p62
      %p64 = scmp.ne.s32.totalorder %s56, %s58
      %p65 = scmp.eq.s32.totalorder %s27, 2
      %p66 = por %p64, %p65
      %p67 = scmp.ne.s32.totalorder %s58, %s59
      %p68 = scmp.eq.s32.totalorder %s27, 0
      %p69 = por %p67, %p68
      %p70 = scmp.ne.s32.totalorder %s58, %s59
      %p71 = scmp.eq.s32.totalorder %s28, 2
      %p72 = por %p70, %p71
      %p74 = scmp.ne.s32.totalorder %s59, %s73
      %p75 = scmp.eq.s32.totalorder %s28, 0
      %p76 = por %p74, %p75
      %s78 = sadd.s32 %s77, 1
      %p81 = scmp.eq.s32.totalorder %s22, 2
      %p82 = scmp.ne.s32.totalorder %s77, %s79
      %p83 = scmp.eq.s32.totalorder %s22, 0
      %p84 = por %p82, %p83
      %p85 = scmp.ne.s32.totalorder %s77, %s79
      %p86 = scmp.eq.s32.totalorder %s27, 2
      %p87 = por %p85, %p86
      %p88 = scmp.ne.s32.totalorder %s79, %s80
      %p89 = scmp.eq.s32.totalorder %s27, 0
      %p90 = por %p88, %p89
      %p91 = scmp.ne.s32.totalorder %s79, %s80
      %p92 = scmp.eq.s32.totalorder %s28, 2
      %p93 = por %p91, %p92
      %p95 = scmp.ne.s32.totalorder %s80, %s94
      %p96 = scmp.eq.s32.totalorder %s28, 0
      %p97 = por %p95, %p96
      %s99 = sadd.s32 %s98, 1
      %p102 = scmp.eq.s32.totalorder %s22, 2
      %p103 = scmp.ne.s32.totalorder %s98, %s100
      %p104 = scmp.eq.s32.totalorder %s22, 0
      %p105 = por %p103, %p104
      %p106 = scmp.ne.s32.totalorder %s98, %s100
      %p107 = scmp.eq.s32.totalorder %s27, 2
      %p108 = por %p106, %p107
      %p109 = scmp.ne.s32.totalorder %s100, %s101
      %p110 = scmp.eq.s32.totalorder %s27, 0
      %p111 = por %p109, %p110
      %p112 = scmp.ne.s32.totalorder %s100, %s101
      %p113 = scmp.eq.s32.totalorder %s28, 2
      %p114 = por %p112, %p113
      %p116 = scmp.ne.s32.totalorder %s101, %s115
      %p117 = scmp.eq.s32.totalorder %s28, 0
      %p118 = por %p116, %p117
      %s119 = ssub.s32 %s22, %s29
      %p120 = scmp.eq.s32.totalorder %s119, 0
      %s122 = sadd.s32 %s121, 1
      %s123 = scalar_select %p120, %s121, %s122
      %p126 = pneg %p120
      %p127 = scmp.eq.s32.totalorder %s22, 2
      %p128 = por %p126, %p127
      %p129 = scmp.ne.s32.totalorder %s121, %s124
      %p130 = scmp.eq.s32.totalorder %s22, 0
      %p131 = por %p129, %p130
      %p132 = scmp.ne.s32.totalorder %s121, %s124
      %p133 = scmp.eq.s32.totalorder %s27, 2
      %p134 = por %p132, %p133
      %p135 = scmp.ne.s32.totalorder %s124, %s125
      %p136 = scmp.eq.s32.totalorder %s27, 0
      %p137 = por %p135, %p136
      %p138 = scmp.ne.s32.totalorder %s124, %s125
      %p139 = scmp.eq.s32.totalorder %s28, 2
      %p140 = por %p138, %p139
      %p142 = scmp.ne.s32.totalorder %s125, %s141
      %p143 = scmp.eq.s32.totalorder %s28, 0
      %p144 = por %p142, %p143
      %s145 = ssub.s32 %s22, %s29
      %p146 = scmp.eq.s32.totalorder %s145, 0
      %s148 = sadd.s32 %s147, 1
      %s149 = scalar_select %p146, %s147, %s148
      %p152 = pneg %p146
      %p153 = scmp.eq.s32.totalorder %s22, 2
      %p154 = por %p152, %p153
      %p155 = scmp.ne.s32.totalorder %s147, %s150
      %p156 = scmp.eq.s32.totalorder %s22, 0
      %p157 = por %p155, %p156
      %p158 = scmp.ne.s32.totalorder %s147, %s150
      %p159 = scmp.eq.s32.totalorder %s27, 2
      %p160 = por %p158, %p159
      %p161 = scmp.ne.s32.totalorder %s150, %s151
      %p162 = scmp.eq.s32.totalorder %s27, 0
      %p163 = por %p161, %p162
      %p164 = scmp.ne.s32.totalorder %s150, %s151
      %p165 = scmp.eq.s32.totalorder %s28, 2
      %p166 = por %p164, %p165
      %p168 = scmp.ne.s32.totalorder %s151, %s167
      %p169 = scmp.eq.s32.totalorder %s28, 0
      %p170 = por %p168, %p169
      %p171 = scmp.le.s32.totalorder 1, %s22
      %p172 = scmp.lt.s32.totalorder %s22, 4
      %p173 = pnand %p171, %p172
      %p174 = pneg %p173
      // Predicated region
      $region9: #{tpu_custom_call.1} parent=5 // pred_check
        _
      $region10: #{tpu_custom_call.1} parent=5 // pred_check_branch
        %176 = sbr.rel (%p173) target = $region12
      $region11: #{tpu_custom_call.1} parent=5 // pred_region
        %s177 = ssub.s32 %s22, 1
        // Predicated region
        $region13: #{tpu_custom_call.1} parent=11 // pred_check
          %p178 = pneg %p69
        $region14: #{tpu_custom_call.1} parent=11 // pred_check_branch
          %180 = sbr.rel (%p178) target = $region16
        $region15: #{tpu_custom_call.1} parent=11 // pred_region
          %s182 = ssub.s32 2048, 2048
          %183 = vsyncadd [#allocation6], %s182
          %s184 = sshll.u32 [#allocation5], 4
          %s185 = int_to_ptr.vmem [resolvable:$true] %s184
          %190 = dma.hbm_to_vmem [thread:$0]  %s1, 2048, %s185, [#allocation6], 128, 128, 8
        $region16: #{tpu_custom_call.1} parent=11 // pred_fallthru
          _
        // Predicated region
        $region17: #{tpu_custom_call.1} parent=11 // pred_check
          %p191 = pneg %p90
        $region18: #{tpu_custom_call.1} parent=11 // pred_check_branch
          %193 = sbr.rel (%p191) target = $region20
        $region19: #{tpu_custom_call.1} parent=11 // pred_region
          _
        $region20: #{tpu_custom_call.1} parent=11 // pred_fallthru
          _
        // Predicated region
        $region21: #{tpu_custom_call.1} parent=11 // pred_check
          %p194 = pneg %p111
        $region22: #{tpu_custom_call.1} parent=11 // pred_check_branch
          %196 = sbr.rel (%p194) target = $region24
        $region23: #{tpu_custom_call.1} parent=11 // pred_region
          %s198 = ssub.s32 2048, 2048
          %199 = vsyncadd [#allocation6], %s198
          %s200 = sshll.u32 [#allocation7], 4
          %s201 = int_to_ptr.vmem [resolvable:$true] %s200
          %206 = dma.hbm_to_vmem [thread:$0]  %s3, 2048, %s201, [#allocation6], 128, 128, 8
        $region24: #{tpu_custom_call.1} parent=11 // pred_fallthru
          _
      $region12: #{tpu_custom_call.1} parent=5 // pred_fallthru
        _
      %p207 = scmp.lt.s32.totalorder %s22, 3
      // Predicated region
      $region25: #{tpu_custom_call.1} parent=5 // pred_check
        %p208 = pneg %p207
      $region26: #{tpu_custom_call.1} parent=5 // pred_check_branch
        %210 = sbr.rel (%p208) target = $region28
      $region27: #{tpu_custom_call.1} parent=5 // pred_region
        // Predicated region
        $region29: #{tpu_custom_call.1} parent=27 // pred_check
          %p211 = pneg %p42
        $region30: #{tpu_custom_call.1} parent=27 // pred_check_branch
          %213 = sbr.rel (%p211) target = $region32
        $region31: #{tpu_custom_call.1} parent=27 // pred_region
          %s214 = sand.u32 %s32, 1
          %s215 = scalar_lea.sflag [#allocation3], %s214
          %s216 = sand.u32 %s32, 1
          %s217 = smul.addr %s216, 8
          %s218 = scalar_lea.vmem [#allocation2], %s217
          %s220 = ssub.s32 128, 128
          %221 = vsyncadd %s215, %s220
          %s222 = smul.addr %s22, 128
          %s223 = scalar_lea.hbm %s0, %s222
          %s225 = sshll.u32 %s218, 4
          %s226 = int_to_ptr.vmem [resolvable:$true] %s225
          %228 = dma.hbm_to_vmem [thread:$0]  %s223, 128, %s226, %s215
        $region32: #{tpu_custom_call.1} parent=27 // pred_fallthru
          _
      $region28: #{tpu_custom_call.1} parent=5 // pred_fallthru
        _
      %p229 = scmp.le.s32.totalorder 1, %s22
      %p230 = scmp.lt.s32.totalorder %s22, 4
      %p231 = pnand %p229, %p230
      %p232 = pneg %p231
      // Predicated region
      $region33: #{tpu_custom_call.1} parent=5 // pred_check
        _
      $region34: #{tpu_custom_call.1} parent=5 // pred_check_branch
        %234 = sbr.rel (%p231) target = $region36
      $region35: #{tpu_custom_call.1} parent=5 // pred_region
        %s235 = ssub.s32 %s22, 1
        %s236 = sand.u32 %s35, 1
        %s237 = scalar_lea.sflag [#allocation3], %s236
        %s238 = sand.u32 %s35, 1
        %s239 = smul.addr %s238, 8
        %s240 = scalar_lea.vmem [#allocation2], %s239
        // Predicated region
        $region37: #{tpu_custom_call.1} parent=35 // pred_check
          %p241 = pneg %p48
        $region38: #{tpu_custom_call.1} parent=35 // pred_check_branch
          %243 = sbr.rel (%p241) target = $region40
        $region39: #{tpu_custom_call.1} parent=35 // pred_region
          %244 = dma.done %s237, 128
        $region40: #{tpu_custom_call.1} parent=35 // pred_fallthru
          _
        // Predicated region
        $region41: #{tpu_custom_call.1} parent=35 // pred_check
          %p245 = pneg %p69
        $region42: #{tpu_custom_call.1} parent=35 // pred_check_branch
          %247 = sbr.rel (%p245) target = $region44
        $region43: #{tpu_custom_call.1} parent=35 // pred_region
          %248 = dma.done [#allocation6], 2048
        $region44: #{tpu_custom_call.1} parent=35 // pred_fallthru
          _
        // Predicated region
        $region45: #{tpu_custom_call.1} parent=35 // pred_check
          %p249 = pneg %p111
        $region46: #{tpu_custom_call.1} parent=35 // pred_check_branch
          %251 = sbr.rel (%p249) target = $region48
        $region47: #{tpu_custom_call.1} parent=35 // pred_region
          %252 = dma.done [#allocation6], 2048
        $region48: #{tpu_custom_call.1} parent=35 // pred_fallthru
          _
        %s253 = sand.u32 %s35, 1
        %s254 = scalar_lea.sflag [#allocation3], %s253
        %s255 = sand.u32 %s35, 1
        %s256 = smul.addr %s255, 8
        %s257 = scalar_lea.vmem [#allocation2], %s256
        %p258 = pneg %p48
        %p259 = pneg %p45
        %p260 = pneg %p69
        %p261 = pneg %p66
        %p262 = pneg %p90
        %p263 = pneg %p87
        %p264 = pneg %p111
        %p265 = pneg %p108
        %p266 = pneg %p137
        %p267 = pneg %p134
        %s268 = sand.u32 %s124, 1
        %s269 = scalar_lea.sflag [#allocation4], %s268
        %s270 = sand.u32 %s124, 1
        %s271 = smul.addr %s270, 8
        %s272 = scalar_lea.vmem [#allocation8], %s271
        %p273 = pneg %p163
        %p274 = pneg %p160
        %s275 = sand.u32 %s150, 1
        %s276 = scalar_lea.sflag [#allocation10], %s275
        %s277 = sand.u32 %s150, 1
        %s278 = smul.addr %s277, 8
        %s279 = scalar_lea.vmem [#allocation9], %s278
        %v280 = vld [vmem:[%s240] sm:$0xff]
        %v281 = vld [vmem:[#allocation5] sm:$0xff]
        %v282 = vld [vmem:[#allocation5 + $0x8] sm:$0xff]
        %v283 = vld [vmem:[#allocation5 + $0x10] sm:$0xff]
        %v284 = vld [vmem:[#allocation5 + $0x18] sm:$0xff]
        %v285 = vld [vmem:[#allocation5 + $0x20] sm:$0xff]
        %v286 = vld [vmem:[#allocation5 + $0x28] sm:$0xff]
        %v287 = vld [vmem:[#allocation5 + $0x30] sm:$0xff]
        %v288 = vld [vmem:[#allocation5 + $0x38] sm:$0xff]
        %v289 = vld [vmem:[#allocation5 + $0x40] sm:$0xff]
        %v290 = vld [vmem:[#allocation5 + $0x48] sm:$0xff]
        %v291 = vld [vmem:[#allocation5 + $0x50] sm:$0xff]
        %v292 = vld [vmem:[#allocation5 + $0x58] sm:$0xff]
        %v293 = vld [vmem:[#allocation5 + $0x60] sm:$0xff]
        %v294 = vld [vmem:[#allocation5 + $0x68] sm:$0xff]
        %v295 = vld [vmem:[#allocation5 + $0x70] sm:$0xff]
        %v296 = vld [vmem:[#allocation5 + $0x78] sm:$0xff]
        %v297 = vld [vmem:[%s2] sm:$0x1]
        %v299 = vlaneseq
        %v300 = vshrl.u32 %v299, 7
        %v301 = vsub.s32 0, %v300
        %v302 = vrot.slane %v297, %v301
        %304 = vmatprep.subr.mxu0 0.0
        %305 = vmatpush1.msra.mxu0 %v281
        %306 = vmatprep.subr.mxu0 0.0
        %307 = vmatpush1.msra.mxu0 %v282
        %308 = vmatprep.subr.mxu0 0.0
        %309 = vmatpush1.msra.mxu0 %v283
        %310 = vmatprep.subr.mxu0 0.0
        %311 = vmatpush1.msra.mxu0 %v284
        %312 = vmatprep.subr.mxu0 0.0
        %313 = vmatpush1.msra.mxu0 %v285
        %314 = vmatprep.subr.mxu0 0.0
        %315 = vmatpush1.msra.mxu0 %v286
        %316 = vmatprep.subr.mxu0 0.0
        %317 = vmatpush1.msra.mxu0 %v287
        %318 = vmatprep.subr.mxu0 0.0
        %319 = vmatpush1.msra.mxu0 %v288
        %320 = vmatprep.subr.mxu0 0.0
        %321 = vmatpush1.msra.mxu0 %v289
        %322 = vmatprep.subr.mxu0 0.0
        %323 = vmatpush1.msra.mxu0 %v290
        %324 = vmatprep.subr.mxu0 0.0
        %325 = vmatpush1.msra.mxu0 %v291
        %326 = vmatprep.subr.mxu0 0.0
        %327 = vmatpush1.msra.mxu0 %v292
        %328 = vmatprep.subr.mxu0 0.0
        %329 = vmatpush1.msra.mxu0 %v293
        %330 = vmatprep.subr.mxu0 0.0
        %331 = vmatpush1.msra.mxu0 %v294
        %332 = vmatprep.subr.mxu0 0.0
        %333 = vmatpush1.msra.mxu0 %v295
        %334 = vmatprep.subr.mxu0 0.0
        %335 = vmatpush1.msra.mxu0 %v296
        %336 = vmatprep.subr.mxu0 0.0
        %337 = vmatpush1.msra.mxu0 0.0
        %338 = vmatprep.subr.mxu0 0.0
        %339 = vmatpush1.msra.mxu0 0.0
        %340 = vmatprep.subr.mxu0 0.0
        %341 = vmatpush1.msra.mxu0 0.0
        %342 = vmatprep.subr.mxu0 0.0
        %343 = vmatpush1.msra.mxu0 0.0
        %344 = vmatprep.subr.mxu0 0.0
        %345 = vmatpush1.msra.mxu0 0.0
        %346 = vmatprep.subr.mxu0 0.0
        %347 = vmatpush1.msra.mxu0 0.0
        %348 = vmatprep.subr.mxu0 0.0
        %349 = vmatpush1.msra.mxu0 0.0
        %350 = vmatprep.subr.mxu0 0.0
        %351 = vmatpush1.msra.mxu0 0.0
        %352 = vmatprep.subr.mxu0 0.0
        %353 = vmatpush1.msra.mxu0 0.0
        %354 = vmatprep.subr.mxu0 0.0
        %355 = vmatpush1.msra.mxu0 0.0
        %356 = vmatprep.subr.mxu0 0.0
        %357 = vmatpush1.msra.mxu0 0.0
        %358 = vmatprep.subr.mxu0 0.0
        %359 = vmatpush1.msra.mxu0 0.0
        %360 = vmatprep.subr.mxu0 0.0
        %361 = vmatpush1.msra.mxu0 0.0
        %362 = vmatprep.subr.mxu0 0.0
        %363 = vmatpush1.msra.mxu0 0.0
        %364 = vmatprep.subr.mxu0 0.0
        %365 = vmatpush1.msra.mxu0 0.0
        %366 = vmatprep.subr.mxu0 0.0
        %367 = vmatpush1.msra.mxu0 0.0
        %368 = vmatprep.mubr.f32.mxu0 0.0
        %369 = vmatmul.mubr.f32.gmra.mrb[0].mxu0 %v280
        %v370 = vpop.f32.mrb[0].mxu0
        %v371 = vadd.f32 %v302, %v370
        %v372 = vpop.f32.mrb[0].mxu0
        %373 = vdwg.mxu0
        %374 = vmax.xlane.f32.xlu0 %v371
        %v375 = vpop.xlane.xlu0 %374
        %v376 = vsub.f32 %v371, %v375
        %v377 = vmul.f32 %v376, 1.442695
        %v378 = vpow.pop %v377
        %379 = vadd.xlane.f32.xlu0 %v378
        %v380 = vpop.xlane.xlu0 %379
        %v381 = vrcp.pop %v380
        %v382 = vmul.f32 %v378, %v381
        %v383 = vld [vmem:[#allocation7] sm:$0xff]
        %v384 = vld [vmem:[#allocation7 + $0x8] sm:$0xff]
        %v385 = vld [vmem:[#allocation7 + $0x10] sm:$0xff]
        %v386 = vld [vmem:[#allocation7 + $0x18] sm:$0xff]
        %v387 = vld [vmem:[#allocation7 + $0x20] sm:$0xff]
        %v388 = vld [vmem:[#allocation7 + $0x28] sm:$0xff]
        %v389 = vld [vmem:[#allocation7 + $0x30] sm:$0xff]
        %v390 = vld [vmem:[#allocation7 + $0x38] sm:$0xff]
        %v391 = vld [vmem:[#allocation7 + $0x40] sm:$0xff]
        %v392 = vld [vmem:[#allocation7 + $0x48] sm:$0xff]
        %v393 = vld [vmem:[#allocation7 + $0x50] sm:$0xff]
        %v394 = vld [vmem:[#allocation7 + $0x58] sm:$0xff]
        %v395 = vld [vmem:[#allocation7 + $0x60] sm:$0xff]
        %v396 = vld [vmem:[#allocation7 + $0x68] sm:$0xff]
        %v397 = vld [vmem:[#allocation7 + $0x70] sm:$0xff]
        %v398 = vld [vmem:[#allocation7 + $0x78] sm:$0xff]
        %399 = vmatprep.subr.mxu0 0.0
        %400 = vmatpush1.msra.mxu0 %v383
        %401 = vmatprep.subr.mxu0 0.0
        %402 = vmatpush1.msra.mxu0 %v384
        %403 = vmatprep.subr.mxu0 0.0
        %404 = vmatpush1.msra.mxu0 %v385
        %405 = vmatprep.subr.mxu0 0.0
        %406 = vmatpush1.msra.mxu0 %v386
        %407 = vmatprep.subr.mxu0 0.0
        %408 = vmatpush1.msra.mxu0 %v387
        %409 = vmatprep.subr.mxu0 0.0
        %410 = vmatpush1.msra.mxu0 %v388
        %411 = vmatprep.subr.mxu0 0.0
        %412 = vmatpush1.msra.mxu0 %v389
        %413 = vmatprep.subr.mxu0 0.0
        %414 = vmatpush1.msra.mxu0 %v390
        %415 = vmatprep.subr.mxu0 0.0
        %416 = vmatpush1.msra.mxu0 %v391
        %417 = vmatprep.subr.mxu0 0.0
        %418 = vmatpush1.msra.mxu0 %v392
        %419 = vmatprep.subr.mxu0 0.0
        %420 = vmatpush1.msra.mxu0 %v393
        %421 = vmatprep.subr.mxu0 0.0
        %422 = vmatpush1.msra.mxu0 %v394
        %423 = vmatprep.subr.mxu0 0.0
        %424 = vmatpush1.msra.mxu0 %v395
        %425 = vmatprep.subr.mxu0 0.0
        %426 = vmatpush1.msra.mxu0 %v396
        %427 = vmatprep.subr.mxu0 0.0
        %428 = vmatpush1.msra.mxu0 %v397
        %429 = vmatprep.subr.mxu0 0.0
        %430 = vmatpush1.msra.mxu0 %v398
        %431 = vmatprep.subr.mxu0 0.0
        %432 = vmatpush1.msra.mxu0 0.0
        %433 = vmatprep.subr.mxu0 0.0
        %434 = vmatpush1.msra.mxu0 0.0
        %435 = vmatprep.subr.mxu0 0.0
        %436 = vmatpush1.msra.mxu0 0.0
        %437 = vmatprep.subr.mxu0 0.0
        %438 = vmatpush1.msra.mxu0 0.0
        %439 = vmatprep.subr.mxu0 0.0
        %440 = vmatpush1.msra.mxu0 0.0
        %441 = vmatprep.subr.mxu0 0.0
        %442 = vmatpush1.msra.mxu0 0.0
        %443 = vmatprep.subr.mxu0 0.0
        %444 = vmatpush1.msra.mxu0 0.0
        %445 = vmatprep.subr.mxu0 0.0
        %446 = vmatpush1.msra.mxu0 0.0
        %447 = vmatprep.subr.mxu0 0.0
        %448 = vmatpush1.msra.mxu0 0.0
        %449 = vmatprep.subr.mxu0 0.0
        %450 = vmatpush1.msra.mxu0 0.0
        %451 = vmatprep.subr.mxu0 0.0
        %452 = vmatpush1.msra.mxu0 0.0
        %453 = vmatprep.subr.mxu0 0.0
        %454 = vmatpush1.msra.mxu0 0.0
        %455 = vmatprep.subr.mxu0 0.0
        %456 = vmatpush1.msra.mxu0 0.0
        %457 = vmatprep.subr.mxu0 0.0
        %458 = vmatpush1.msra.mxu0 0.0
        %459 = vmatprep.subr.mxu0 0.0
        %460 = vmatpush1.msra.mxu0 0.0
        %461 = vmatprep.subr.mxu0 0.0
        %462 = vmatpush1.msra.mxu0 0.0
        %463 = vmatprep.mubr.f32.mxu0 0.0
        %464 = vmatmul.mubr.f32.gmra.mrb[0].mxu0 %v382
        %v465 = vpop.f32.mrb[0].mxu0
        %v466 = vadd.f32 0.0, %v465
        %v467 = vpop.f32.mrb[0].mxu0
        %468 = vdwg.mxu0
        %v469 = vmul.f32 %v280, %v466
        %470 = vst [vmem:[%s272] sm:$0xff] %v469
        %s471 = smul.u32 %s27, 8
        %v472 = vlaneseq
        %v473 = vshrl.u32 %v472, 7
        %v474 = vstv %s471
        %v475 = vadd.s32 %v474, %v473
        %vm476 = vcmp.lt.s32.totalorder %v475, 20
        %v477 = vsel %vm476, %v382, 0.0
        %v478 = vrot.slane %v477, 4
        %v479 = vadd.f32 %v477, %v478
        %v480 = vrot.slane %v479, 2
        %v481 = vadd.f32 %v479, %v480
        %v482 = vrot.slane %v481, 1
        %v483 = vadd.f32 %v481, %v482
        %v484 = vmul.f32 %v483, 0.125
        %485 = vst [vmem:[%s279] sm:$0xff] %v484
        %s486 = sand.u32 %s124, 1
        %s487 = scalar_lea.sflag [#allocation4], %s486
        %s488 = sand.u32 %s124, 1
        %s489 = smul.addr %s488, 8
        %s490 = scalar_lea.vmem [#allocation8], %s489
        %s491 = sand.u32 %s150, 1
        %s492 = scalar_lea.sflag [#allocation10], %s491
        %s493 = sand.u32 %s150, 1
        %s494 = smul.addr %s493, 8
        %s495 = scalar_lea.vmem [#allocation9], %s494
        // Predicated region
        $region49: #{tpu_custom_call.1} parent=35 // pred_check
          %p496 = pneg %p134
        $region50: #{tpu_custom_call.1} parent=35 // pred_check_branch
          %498 = sbr.rel (%p496) target = $region52
        $region51: #{tpu_custom_call.1} parent=35 // pred_region
          %s500 = ssub.s32 128, 128
          %501 = vsyncadd %s487, %s500
          %s502 = smul.addr %s27, 128
          %s503 = scalar_lea.hbm %s4, %s502
          %s505 = sshll.u32 %s490, 4
          %s506 = int_to_ptr.vmem [resolvable:$true] %s505
          %508 = dma.vmem_to_hbm [thread:$0]  %s506, 128, %s503, %s487
        $region52: #{tpu_custom_call.1} parent=35 // pred_fallthru
          _
        // Predicated region
        $region53: #{tpu_custom_call.1} parent=35 // pred_check
          %p509 = pneg %p160
        $region54: #{tpu_custom_call.1} parent=35 // pred_check_branch
          %511 = sbr.rel (%p509) target = $region56
        $region55: #{tpu_custom_call.1} parent=35 // pred_region
          %s513 = ssub.s32 128, 128
          %514 = vsyncadd %s492, %s513
          %s515 = smul.addr %s27, 128
          %s516 = scalar_lea.hbm %s5, %s515
          %s518 = sshll.u32 %s495, 4
          %s519 = int_to_ptr.vmem [resolvable:$true] %s518
          %521 = dma.vmem_to_hbm [thread:$0]  %s519, 128, %s516, %s492
        $region56: #{tpu_custom_call.1} parent=35 // pred_fallthru
          _
      $region36: #{tpu_custom_call.1} parent=5 // pred_fallthru
        _
      %p522 = scmp.le.s32.totalorder 2, %s22
      // Predicated region
      $region57: #{tpu_custom_call.1} parent=5 // pred_check
        %p523 = pneg %p522
      $region58: #{tpu_custom_call.1} parent=5 // pred_check_branch
        %525 = sbr.rel (%p523) target = $region60
      $region59: #{tpu_custom_call.1} parent=5 // pred_region
        %s526 = ssub.s32 %s22, 2
        // Predicated region
        $region61: #{tpu_custom_call.1} parent=59 // pred_check
          %p527 = pneg %p140
        $region62: #{tpu_custom_call.1} parent=59 // pred_check_branch
          %529 = sbr.rel (%p527) target = $region64
        $region63: #{tpu_custom_call.1} parent=59 // pred_region
          %s530 = sand.u32 %s125, 1
          %s531 = scalar_lea.sflag [#allocation4], %s530
          %s532 = sand.u32 %s125, 1
          %s533 = smul.addr %s532, 8
          %s534 = scalar_lea.vmem [#allocation8], %s533
          %535 = dma.done %s531, 128
        $region64: #{tpu_custom_call.1} parent=59 // pred_fallthru
          _
        // Predicated region
        $region65: #{tpu_custom_call.1} parent=59 // pred_check
          %p536 = pneg %p166
        $region66: #{tpu_custom_call.1} parent=59 // pred_check_branch
          %538 = sbr.rel (%p536) target = $region68
        $region67: #{tpu_custom_call.1} parent=59 // pred_region
          %s539 = sand.u32 %s151, 1
          %s540 = scalar_lea.sflag [#allocation10], %s539
          %s541 = sand.u32 %s151, 1
          %s542 = smul.addr %s541, 8
          %s543 = scalar_lea.vmem [#allocation9], %s542
          %544 = dma.done %s540, 128
        $region68: #{tpu_custom_call.1} parent=59 // pred_fallthru
          _
      $region60: #{tpu_custom_call.1} parent=5 // pred_fallthru
        _
    $region6: #{tpu_custom_call.1} parent=1 // loop_footer
      %s26 = sadd.s32 1, %s22
    $region7: #{tpu_custom_call.1} parent=1 // loop_footer_branch
      %21 = sbr.rel target = $region3
    $region8: #{tpu_custom_call.1} parent=1 // loop_exit
      _
    %545 = vsyncpa [#allocation3], 1
    %s546 = scalar_lea.sflag [#allocation3], 1
    %547 = vsyncpa %s546, 1
    %548 = vsyncpa [#allocation6], 1
    %549 = vsyncpa [#allocation4], 1
    %s550 = scalar_lea.sflag [#allocation4], 1
    %551 = vsyncpa %s550, 1
    %552 = vsyncpa [#allocation10], 1
    %s553 = scalar_lea.sflag [#allocation10], 1
    %554 = vsyncpa %s553, 1

</llo_original>
